<compile_context>
chip_gen: v6e
topology: v6e:2x2x1
jax: 0.10.0
libtpu: 0.0.40
codegen_flags: <defaults>
</compile_context>

<pallas_src>
import functools

import jax
import jax.numpy as jnp
from jax.experimental import pallas as pl
from jax.experimental.pallas import tpu as pltpu


_NEG_LARGE = -1e30  # effectively -inf for padded expert lanes (avoids inf arith)


def _router_kernel(x_ref, w_ref, b_ref, out_ref, *, top_k: int):
    # x_ref: (T, D) compute dtype   w_ref: (D, Ep)   b_ref: (1, Ep) f32
    # out_ref: (T, Ep) f32
    logits = jnp.dot(x_ref[...], w_ref[...],
                     preferred_element_type=jnp.float32) + b_ref[...]

    # Softmax pieces; the divide is deferred until after top-k selection
    # (softmax is monotone, so selection can run directly on the logits).
    m = jnp.max(logits, axis=-1, keepdims=True)
    e = jnp.exp(logits - m)                       # padded lanes underflow to 0
    denom = jnp.sum(e, axis=-1, keepdims=True)

    Ep = logits.shape[-1]
    lane = jax.lax.broadcasted_iota(jnp.int32, logits.shape, dimension=1)

    # Iterative top-k (k is small & static): repeatedly find the row max,
    # select its (first) position, then mask it out.  NOTE: assumes
    # top_k <= num_experts (otherwise padded lanes could be re-selected,
    # which is still harmless for the mask output).
    sel = jnp.zeros(logits.shape, dtype=jnp.bool_)
    masked = logits
    neg_inf = jnp.full_like(logits, -jnp.inf)
    for _ in range(top_k):
        mx = jnp.max(masked, axis=-1, keepdims=True)
        is_max = masked == mx
        idx = jnp.min(jnp.where(is_max, lane, Ep), axis=-1, keepdims=True)
        onehot = lane == idx
        sel = jnp.logical_or(sel, onehot)
        masked = jnp.where(onehot, neg_inf, masked)

    # Exact divide keeps ~1e-5 parity with a softmax reference;
    # pl.reciprocal(denom, approx=True) would move this to the EUP slot at
    # ~1e-3 relative error if that tolerance is acceptable.
    out_ref[...] = (jnp.where(sel, e, 0.0) / denom).astype(out_ref.dtype)


def _round_up(v, m):
    return ((v + m - 1) // m) * m


def topk_router(x, weight, bias, top_k=2, *,
                compute_dtype=jnp.bfloat16,
                vmem_budget_bytes=28 * 1024 * 1024,
                max_token_tile=1024):
    """x: [B, S, D]; weight: [E, D]; bias: [E].  Returns dispatch mask [B, S, E]."""
    B, S, D = x.shape
    E = weight.shape[0]
    N = B * S

    # Lane-dense output: pad experts up to a multiple of 128.
    E_pad = _round_up(E, 128)
    in_itemsize = jnp.dtype(compute_dtype).itemsize

    # Pick the biggest token tile whose (double-buffered) footprint fits the
    # VMEM budget; multiple of 16 (bf16 sublane packing), capped by the token
    # count so tiny problems don't over-pad.
    resident = 2 * (D * E_pad * in_itemsize + E_pad * 4)   # W + bias (2 bufs)
    per_token = 2 * (D * in_itemsize + E_pad * 4)          # x + out  (2 bufs)
    tile = max(16, (vmem_budget_bytes - resident) // per_token)
    tile = min(tile, max_token_tile, _round_up(N, 16))
    tile = max(16, (tile // 16) * 16)

    N_pad = _round_up(N, tile)

    x2 = x.reshape(N, D).astype(compute_dtype)
    if N_pad != N:
        x2 = jnp.pad(x2, ((0, N_pad - N), (0, 0)))
    w_t = weight.T.astype(compute_dtype)                   # (D, E)
    b2 = bias.reshape(1, E).astype(jnp.float32)
    if E_pad != E:
        w_t = jnp.pad(w_t, ((0, 0), (0, E_pad - E)))
        b2 = jnp.pad(b2, ((0, 0), (0, E_pad - E)), constant_values=_NEG_LARGE)

    kernel = functools.partial(_router_kernel, top_k=top_k)

    # Scoped-VMEM limit: enough for the chosen tile, never above 48 MiB so it
    # stays safely under v7x's 64 MiB physical VMEM.
    vmem_limit = int(min(48 * 1024 * 1024,
                         max(32 * 1024 * 1024,
                             resident + tile * per_token + (4 << 20))))

    out = pl.pallas_call(
        kernel,
        out_shape=jax.ShapeDtypeStruct((N_pad, E_pad), jnp.float32),
        grid_spec=pltpu.PrefetchScalarGridSpec(
            num_scalar_prefetch=0,
            grid=(N_pad // tile,),
            in_specs=[
                pl.BlockSpec((tile, D), lambda i: (i, 0)),
                # W / bias have a constant index_map → fetched once, resident.
                pl.BlockSpec((D, E_pad), lambda i: (0, 0)),
                pl.BlockSpec((1, E_pad), lambda i: (0, 0)),
            ],
            out_specs=pl.BlockSpec((tile, E_pad), lambda i: (i, 0)),
        ),
        compiler_params=pltpu.CompilerParams(
            dimension_semantics=("parallel",),  # token axis shards across TCs
            vmem_limit_bytes=vmem_limit),
    )(x2, w_t, b2)

    return out[:N, :E].reshape(B, S, E)


def _reference(x, weight, bias, top_k=2, compute_dtype=jnp.bfloat16):
    # Same bf16-input / f32-accumulate matmul as the kernel, then exact softmax
    # + scatter of top-k scores (matches PyTorch eval-mode forward).
    logits = jnp.einsum("bsd,ed->bse",
                        x.astype(compute_dtype), weight.astype(compute_dtype),
                        preferred_element_type=jnp.float32) + bias
    scores = jax.nn.softmax(logits, axis=-1)
    topk_scores, topk_idx = jax.lax.top_k(scores, top_k)
    oh = jax.nn.one_hot(topk_idx, scores.shape[-1], dtype=scores.dtype)
    return jnp.sum(oh * topk_scores[..., None], axis=-2)


if __name__ == "__main__":
    B, S, D, E, TOP_K = 2, 8, 32, 8, 2

    key = jax.random.PRNGKey(0)
    kx, kw, kb = jax.random.split(key, 3)

    # Deterministic nn.Linear-style init: U(-1/sqrt(D), 1/sqrt(D))
    bound = 1.0 / (D ** 0.5)
    x = jax.random.normal(kx, (B, S, D), dtype=jnp.float32)
    weight = jax.random.uniform(kw, (E, D), minval=-bound, maxval=bound,
                                dtype=jnp.float32)
    bias = jax.random.uniform(kb, (E,), minval=-bound, maxval=bound,
                              dtype=jnp.float32)

    out = topk_router(x, weight, bias, top_k=TOP_K)
    out = jax.block_until_ready(out)

    ref = _reference(x, weight, bias, top_k=TOP_K)
    assert out.shape == (B, S, E)
    assert jnp.allclose(out, ref, atol=2e-5, rtol=1e-4), "mismatch vs reference"

    print("KERNEL_OK")
</pallas_src>

<mosaic_0001>
module attributes {stable_mosaic.version = 11 : i64} {
  func.func @_router_kernel(%arg0: i32, %arg1: memref<16x32xbf16, #tpu.memory_space<vmem>>, %arg2: memref<32x128xbf16, #tpu.memory_space<vmem>>, %arg3: memref<1x128xf32, #tpu.memory_space<vmem>>, %arg4: memref<16x128xf32, #tpu.memory_space<vmem>>) attributes {dimension_semantics = [#tpu.dimension_semantics<parallel>], iteration_bounds = array<i64: 1>, scalar_prefetch = 0 : i64, scratch_operands = 0 : i64, tpu.core_type = #tpu.core_type<tc>, window_params = [{transform_indices = @transform_0, window_bounds = array<i64: 16, 32>}, {pipeline_mode = #tpu.pipeline_mode<synchronous>, transform_indices = @transform_1, window_bounds = array<i64: 32, 128>}, {pipeline_mode = #tpu.pipeline_mode<synchronous>, transform_indices = @transform_2, window_bounds = array<i64: 1, 128>}, {transform_indices = @transform_3, window_bounds = array<i64: 16, 128>}]} {
    %c0 = arith.constant 0 : index
    %c0_0 = arith.constant 0 : index
    %0 = vector.load %arg1[%c0, %c0_0] : memref<16x32xbf16, #tpu.memory_space<vmem>>, vector<16x32xbf16>
    %c0_1 = arith.constant 0 : index
    %c0_2 = arith.constant 0 : index
    %1 = vector.load %arg2[%c0_1, %c0_2] : memref<32x128xbf16, #tpu.memory_space<vmem>>, vector<32x128xbf16>
    %cst = arith.constant dense<0.000000e+00> : vector<16x128xf32>
    %2 = tpu.matmul %0, %1, %cst {dimension_numbers = #tpu.dot_dimension_numbers<[1], [0], [0], [1], [0, 0, 1, 1], [], []>} : vector<16x32xbf16>, vector<32x128xbf16>, vector<16x128xf32> -> vector<16x128xf32>
    %c0_3 = arith.constant 0 : index
    %c0_4 = arith.constant 0 : index
    %3 = vector.load %arg3[%c0_3, %c0_4] : memref<1x128xf32, #tpu.memory_space<vmem>>, vector<1x128xf32>
    %4 = vector.broadcast %3 : vector<1x128xf32> to vector<16x128xf32>
    %5 = arith.addf %2, %4 : vector<16x128xf32>
    %cst_5 = arith.constant dense<0xFF800000> : vector<16xf32>
    %6 = vector.multi_reduction <maximumf>, %5, %cst_5 [1] : vector<16x128xf32> to vector<16xf32>
    %7 = vector.shape_cast %6 : vector<16xf32> to vector<16x1xf32>
    %8 = vector.broadcast %7 : vector<16x1xf32> to vector<16x128xf32>
    %9 = arith.subf %5, %8 : vector<16x128xf32>
    %10 = math.exp %9 : vector<16x128xf32>
    %cst_6 = arith.constant dense<0.000000e+00> : vector<16xf32>
    %11 = vector.multi_reduction <add>, %10, %cst_6 [1] : vector<16x128xf32> to vector<16xf32>
    %12 = vector.shape_cast %11 : vector<16xf32> to vector<16x1xf32>
    %13 = tpu.iota {dimensions = array<i32: 1>} : vector<16x128xi32>
    %false = arith.constant false
    %14 = vector.broadcast %false : i1 to vector<16x128xi1>
    %cst_7 = arith.constant 0xFF800000 : f32
    %15 = vector.broadcast %cst_7 : f32 to vector<16x128xf32>
    %cst_8 = arith.constant dense<0xFF800000> : vector<16xf32>
    %16 = vector.multi_reduction <maximumf>, %5, %cst_8 [1] : vector<16x128xf32> to vector<16xf32>
    %17 = vector.shape_cast %16 : vector<16xf32> to vector<16x1xf32>
    %18 = vector.broadcast %17 : vector<16x1xf32> to vector<16x128xf32>
    %19 = arith.cmpf oeq, %5, %18 : vector<16x128xf32>
    %c128_i32 = arith.constant 128 : i32
    %20 = vector.broadcast %c128_i32 : i32 to vector<16x128xi32>
    %21 = arith.select %19, %13, %20 : vector<16x128xi1>, vector<16x128xi32>
    %cst_9 = arith.constant dense<2147483647> : vector<16xi32>
    %22 = vector.multi_reduction <minsi>, %21, %cst_9 [1] : vector<16x128xi32> to vector<16xi32>
    %23 = vector.shape_cast %22 : vector<16xi32> to vector<16x1xi32>
    %24 = vector.broadcast %23 : vector<16x1xi32> to vector<16x128xi32>
    %25 = arith.cmpi eq, %13, %24 : vector<16x128xi32>
    %26 = arith.ori %14, %25 : vector<16x128xi1>
    %27 = arith.select %25, %15, %5 : vector<16x128xi1>, vector<16x128xf32>
    %cst_10 = arith.constant dense<0xFF800000> : vector<16xf32>
    %28 = vector.multi_reduction <maximumf>, %27, %cst_10 [1] : vector<16x128xf32> to vector<16xf32>
    %29 = vector.shape_cast %28 : vector<16xf32> to vector<16x1xf32>
    %30 = vector.broadcast %29 : vector<16x1xf32> to vector<16x128xf32>
    %31 = arith.cmpf oeq, %27, %30 : vector<16x128xf32>
    %c128_i32_11 = arith.constant 128 : i32
    %32 = vector.broadcast %c128_i32_11 : i32 to vector<16x128xi32>
    %33 = arith.select %31, %13, %32 : vector<16x128xi1>, vector<16x128xi32>
    %cst_12 = arith.constant dense<2147483647> : vector<16xi32>
    %34 = vector.multi_reduction <minsi>, %33, %cst_12 [1] : vector<16x128xi32> to vector<16xi32>
    %35 = vector.shape_cast %34 : vector<16xi32> to vector<16x1xi32>
    %36 = vector.broadcast %35 : vector<16x1xi32> to vector<16x128xi32>
    %37 = arith.cmpi eq, %13, %36 : vector<16x128xi32>
    %38 = arith.ori %26, %37 : vector<16x128xi1>
    %cst_13 = arith.constant 0.000000e+00 : f32
    %39 = vector.broadcast %cst_13 : f32 to vector<16x128xf32>
    %40 = arith.select %38, %10, %39 : vector<16x128xi1>, vector<16x128xf32>
    %41 = vector.broadcast %12 : vector<16x1xf32> to vector<16x128xf32>
    %42 = arith.divf %40, %41 : vector<16x128xf32>
    %c0_14 = arith.constant 0 : index
    %c0_15 = arith.constant 0 : index
    %43 = vector.load %arg4[%c0_14, %c0_15] : memref<16x128xf32, #tpu.memory_space<vmem>>, vector<16x128xf32>
    tpu.vector_store %arg4[%c0_14, %c0_15], %42 {strides = array<i32>} : memref<16x128xf32, #tpu.memory_space<vmem>>, vector<16x128xf32>,
    return
  }
  func.func @transform_0(%arg0: i32) -> (i32, i32) {
    %c0_i32 = arith.constant 0 : i32
    %c0_i32_0 = arith.constant 0 : i32
    return %arg0, %c0_i32 : i32, i32
  }
  func.func @transform_1(%arg0: i32) -> (i32, i32) {
    %c0_i32 = arith.constant 0 : i32
    %c0_i32_0 = arith.constant 0 : i32
    %c0_i32_1 = arith.constant 0 : i32
    return %c0_i32, %c0_i32_0 : i32, i32
  }
  func.func @transform_2(%arg0: i32) -> (i32, i32) {
    %c0_i32 = arith.constant 0 : i32
    %c0_i32_0 = arith.constant 0 : i32
    %c0_i32_1 = arith.constant 0 : i32
    return %c0_i32, %c0_i32_0 : i32, i32
  }
  func.func @transform_3(%arg0: i32) -> (i32, i32) {
    %c0_i32 = arith.constant 0 : i32
    %c0_i32_0 = arith.constant 0 : i32
    return %arg0, %c0_i32 : i32, i32
  }
}

</mosaic_0001>

<llo_original>
// kernel: tpu_custom_call.1
$region0: #{tpu_custom_call.1}
  #allocation0 [shape = 'u32[]', space=smem, size = 0x4, offset = 0x4, fixed_abs, tag = 'smem constant byte address 0x4 - core index']
  #allocation1 [shape = 'u32[144,128]{1,0:T(1,128)}', space=vmem, size = 0x12000, scoped, tag = 'internal scratch']
  %s0 = inlined_call_operand.hbm [shape: bf16[16,32], index: 0, kind: input, shape index: {}]
  %s1 = inlined_call_operand.hbm [shape: bf16[32,128], index: 1, kind: input, shape index: {}]
  %s2 = inlined_call_operand.vmem [shape: f32[1,128], index: 2, kind: input, shape index: {}]
  %s3 = inlined_call_operand.hbm [shape: f32[16,128], index: 3, kind: output, shape index: {}]
  %s4 = sld [smem:[#allocation0]]
  $region30: #{tpu_custom_call.1} parent=0
    _
  %s6 = ssub.s32 1, %s4
  %s7 = scalar_select 0, %s6, %s4
  $region1: #{tpu_custom_call.1} parent=0
    #allocation2 [shape = 'u8[4096]{0}', space=vmem, size = 0x1000, scoped, tag = 'input window, operand 0, single buffered']
    #allocation3 [shape = 's32[1]{0}', space=sflag, size = 0x4, scoped, tag = 'scoped memory for tpu_custom_call.1']
    #allocation4 [shape = 's32[1]{0}', space=sflag, size = 0x4, scoped, tag = 'scoped memory for tpu_custom_call.1']
    #allocation5 [shape = 'u8[8192]{0}', space=vmem, size = 0x2000, scoped, tag = 'input window, operand 1, single buffered']
    #allocation6 [shape = 's32[1]{0}', space=sflag, size = 0x4, scoped, tag = 'scoped memory for tpu_custom_call.1']
    #allocation7 [shape = 'u8[8192]{0}', space=vmem, size = 0x2000, scoped, tag = 'output window, operand 0, single buffered']
    %8 = vsyncpa [#allocation3], 0
    %9 = vsyncpa [#allocation6], 0
    %10 = vsyncpa [#allocation4], 0
    // Predicated region
    $region2: #{tpu_custom_call.1} parent=1 // pred_check
      _
    $region3: #{tpu_custom_call.1} parent=1 // pred_check_branch
      %12 = sbr.rel (0) target = $region5
    $region4: #{tpu_custom_call.1} parent=1 // pred_region
      %s14 = ssub.s32 128, 128
      %15 = vsyncadd [#allocation3], %s14
      %s16 = sshll.u32 [#allocation2], 4
      %s17 = int_to_ptr.vmem [resolvable:$true] %s16
      %22 = dma.hbm_to_vmem [thread:$0]  %s0, 128, %s17, [#allocation3], 64, 64, 4
    $region5: #{tpu_custom_call.1} parent=1 // pred_fallthru
      _
    // Predicated region
    $region6: #{tpu_custom_call.1} parent=1 // pred_check
      _
    $region7: #{tpu_custom_call.1} parent=1 // pred_check_branch
      %24 = sbr.rel (0) target = $region9
    $region8: #{tpu_custom_call.1} parent=1 // pred_region
      %s26 = ssub.s32 256, 256
      %27 = vsyncadd [#allocation6], %s26
      %s28 = sshll.u32 [#allocation5], 4
      %s29 = int_to_ptr.vmem [resolvable:$true] %s28
      %34 = dma.hbm_to_vmem [thread:$0]  %s1, 256, %s29, [#allocation6], 64, 64, 4
    $region9: #{tpu_custom_call.1} parent=1 // pred_fallthru
      _
    // Predicated region
    $region10: #{tpu_custom_call.1} parent=1 // pred_check
      _
    $region11: #{tpu_custom_call.1} parent=1 // pred_check_branch
      %36 = sbr.rel (0) target = $region13
    $region12: #{tpu_custom_call.1} parent=1 // pred_region
      _
    $region13: #{tpu_custom_call.1} parent=1 // pred_fallthru
      _
    // Predicated region
    $region14: #{tpu_custom_call.1} parent=1 // pred_check
      _
    $region15: #{tpu_custom_call.1} parent=1 // pred_check_branch
      %38 = sbr.rel (0) target = $region17
    $region16: #{tpu_custom_call.1} parent=1 // pred_region
      %39 = dma.done [#allocation3], 128
    $region17: #{tpu_custom_call.1} parent=1 // pred_fallthru
      _
    // Predicated region
    $region18: #{tpu_custom_call.1} parent=1 // pred_check
      _
    $region19: #{tpu_custom_call.1} parent=1 // pred_check_branch
      %41 = sbr.rel (0) target = $region21
    $region20: #{tpu_custom_call.1} parent=1 // pred_region
      %42 = dma.done [#allocation6], 256
    $region21: #{tpu_custom_call.1} parent=1 // pred_fallthru
      _
    %v44 = vld [vmem:[#allocation2] sm:$0xf]
    %v45 = vld [vmem:[#allocation2 + $0x4] sm:$0xf]
    %v46 = vld [vmem:[#allocation5] sm:$0xf]
    %v47 = vld [vmem:[#allocation5 + $0x4] sm:$0xf]
    %v48 = vld [vmem:[#allocation5 + $0x8] sm:$0xf]
    %v49 = vld [vmem:[#allocation5 + $0xc] sm:$0xf]
    %v50 = vld [vmem:[%s2] sm:$0x1]
    %v52 = vlaneseq
    %v53 = vshrl.u32 %v52, 7
    %v54 = vsub.s32 0, %v53
    %v55 = vrot.slane %v50, %v54
    %v59 = vunpack.c.l.b16 %v44
    %v60 = vunpack.c.l.b16 %v45
    %v61 = vpack.c.b16 %v60, %v59
    %v66 = vunpack.c.l.b16 %v46
    %v67 = vunpack.c.l.b16 %v47
    %v68 = vunpack.c.l.b16 %v48
    %v69 = vunpack.c.l.b16 %v49
    %v70 = vpack.c.b16 %v67, %v66
    %v71 = vpack.c.b16 %v69, %v68
    %vm74 = vcmask 261120
    %v76 = vsel %vm74, %v61, 0
    %78 = vmatprep.subr.bf16.mxu0 0
    %79 = vmatpush1.bf16.msra.mxu0 0
    %80 = vmatprep.subr.bf16.mxu0 0
    %81 = vmatpush1.bf16.msra.mxu0 0
    %82 = vmatprep.subr.bf16.mxu0 0
    %83 = vmatpush1.bf16.msra.mxu0 0
    %84 = vmatprep.subr.bf16.mxu0 0
    %85 = vmatpush1.bf16.msra.mxu0 0
    %86 = vmatprep.subr.bf16.mxu0 0
    %87 = vmatpush1.bf16.msra.mxu0 0
    %88 = vmatprep.subr.bf16.mxu0 0
    %89 = vmatpush1.bf16.msra.mxu0 0
    %90 = vmatprep.subr.bf16.mxu0 0
    %91 = vmatpush1.bf16.msra.mxu0 %v71
    %92 = vmatprep.subr.bf16.mxu0 0
    %93 = vmatpush1.bf16.msra.mxu0 %v70
    %94 = vmatprep.subr.bf16.mxu0 0
    %95 = vmatpush2.bf16.msra.mxu0 0
    %96 = vmatprep.subr.bf16.mxu0 0
    %97 = vmatpush2.bf16.msra.mxu0 0
    %98 = vmatprep.subr.bf16.mxu0 0
    %99 = vmatpush2.bf16.msra.mxu0 0
    %100 = vmatprep.subr.bf16.mxu0 0
    %101 = vmatpush2.bf16.msra.mxu0 0
    %102 = vmatprep.subr.bf16.mxu0 0
    %103 = vmatpush2.bf16.msra.mxu0 0
    %104 = vmatprep.subr.bf16.mxu0 0
    %105 = vmatpush2.bf16.msra.mxu0 0
    %106 = vmatprep.subr.bf16.mxu0 0
    %107 = vmatpush2.bf16.msra.mxu0 0
    %108 = vmatprep.subr.bf16.mxu0 0
    %109 = vmatpush2.bf16.msra.mxu0 0
    %110 = vmatprep.mubr.bf16.mxu0 0
    %111 = vmatmul.mubr.bf16.gmra.mxu0 %v76
    %v112 = vpop.f32.mrf.mxu0
    %v113 = vadd.f32 %v55, %v112
    %v114 = vpop.f32.mrf.mxu0
    %v115 = vpop.f32.mrf.mxu0
    %v116 = vadd.f32 %v55, %v115
    %v117 = vpop.f32.mrf.mxu0
    %118 = vdwg.mxu0
    %119 = vmax.xlane.f32.xlu0 %v113
    %v120 = vpop.xlane.xlu0 %119
    %121 = vmax.xlane.f32.xlu0 %v116
    %v122 = vpop.xlane.xlu0 %121
    %v123 = vsub.f32 %v113, %v120
    %v124 = vsub.f32 %v116, %v122
    %v125 = vmul.f32 %v123, 1.442695
    %v126 = vpow.pop %v125
    %v127 = vmul.f32 %v124, 1.442695
    %v128 = vpow.pop %v127
    %129 = vadd.xlane.f32.xlu0 %v126
    %v130 = vpop.xlane.xlu0 %129
    %131 = vadd.xlane.f32.xlu0 %v128
    %v132 = vpop.xlane.xlu0 %131
    %v133 = vlaneseq
    %v134 = vand.u32 %v133, 127
    %vm135 = vcmp.eq.f32.partialorder %v113, %v120
    %vm136 = vcmp.eq.f32.partialorder %v116, %v122
    %v137 = vsel %vm135, %v134, 128
    %v138 = vsel %vm136, %v134, 128
    %v139 = vand.u32 %v137, 65535
    %v140 = vshra.s32 %v137, 16
    %v141 = vcvt.s32.f32 %v139
    %v142 = vcvt.s32.f32 %v140
    %143 = vmin.xlane.f32.xlu0 %v142
    %v144 = vpop.xlane.xlu0 %143
    %vm145 = vcmp.eq.f32.partialorder %v142, %v144
    %v146 = vsel %vm145, %v141, inf
    %147 = vmin.xlane.f32.xlu0 %v146
    %v148 = vpop.xlane.xlu0 %147
    %v149 = vcvt.f32.s32 %v148
    %v150 = vcvt.f32.s32 %v144
    %v151 = vshll.u32 %v150, 16
    %v152 = vadd.s32 %v151, %v149
    %v153 = vand.u32 %v138, 65535
    %v154 = vshra.s32 %v138, 16
    %v155 = vcvt.s32.f32 %v153
    %v156 = vcvt.s32.f32 %v154
    %157 = vmin.xlane.f32.xlu0 %v156
    %v158 = vpop.xlane.xlu0 %157
    %vm159 = vcmp.eq.f32.partialorder %v156, %v158
    %v160 = vsel %vm159, %v155, inf
    %161 = vmin.xlane.f32.xlu0 %v160
    %v162 = vpop.xlane.xlu0 %161
    %v163 = vcvt.f32.s32 %v162
    %v164 = vcvt.f32.s32 %v158
    %v165 = vshll.u32 %v164, 16
    %v166 = vadd.s32 %v165, %v163
    %vm167 = vcmp.eq.s32.totalorder %v134, %v152
    %vm168 = vcmp.eq.s32.totalorder %v134, %v166
    %v169 = vsel %vm167, -inf, %v113
    %v170 = vsel %vm168, -inf, %v116
    %171 = vmax.xlane.f32.xlu0 %v169
    %v172 = vpop.xlane.xlu0 %171
    %173 = vmax.xlane.f32.xlu0 %v170
    %v174 = vpop.xlane.xlu0 %173
    %vm175 = vcmp.eq.f32.partialorder %v169, %v172
    %vm176 = vcmp.eq.f32.partialorder %v170, %v174
    %v177 = vsel %vm175, %v134, 128
    %v178 = vsel %vm176, %v134, 128
    %v179 = vand.u32 %v177, 65535
    %v180 = vshra.s32 %v177, 16
    %v181 = vcvt.s32.f32 %v179
    %v182 = vcvt.s32.f32 %v180
    %183 = vmin.xlane.f32.xlu0 %v182
    %v184 = vpop.xlane.xlu0 %183
    %vm185 = vcmp.eq.f32.partialorder %v182, %v184
    %v186 = vsel %vm185, %v181, inf
    %187 = vmin.xlane.f32.xlu0 %v186
    %v188 = vpop.xlane.xlu0 %187
    %v189 = vcvt.f32.s32 %v188
    %v190 = vcvt.f32.s32 %v184
    %v191 = vshll.u32 %v190, 16
    %v192 = vadd.s32 %v191, %v189
    %v193 = vand.u32 %v178, 65535
    %v194 = vshra.s32 %v178, 16
    %v195 = vcvt.s32.f32 %v193
    %v196 = vcvt.s32.f32 %v194
    %197 = vmin.xlane.f32.xlu0 %v196
    %v198 = vpop.xlane.xlu0 %197
    %vm199 = vcmp.eq.f32.partialorder %v196, %v198
    %v200 = vsel %vm199, %v195, inf
    %201 = vmin.xlane.f32.xlu0 %v200
    %v202 = vpop.xlane.xlu0 %201
    %v203 = vcvt.f32.s32 %v202
    %v204 = vcvt.f32.s32 %v198
    %v205 = vshll.u32 %v204, 16
    %v206 = vadd.s32 %v205, %v203
    %vm207 = vcmp.eq.s32.totalorder %v134, %v192
    %vm208 = vcmp.eq.s32.totalorder %v134, %v206
    %vm209 = vmor %vm167, %vm207
    %vm210 = vmor %vm168, %vm208
    %v211 = vsel %vm209, %v126, 0.0
    %v212 = vsel %vm210, %v128, 0.0
    %v213 = vrcp.pop %v130
    %v214 = vmul.f32 %v211, %v213
    %v215 = vrcp.pop %v132
    %v216 = vmul.f32 %v212, %v215
    %217 = vst [vmem:[#allocation7] sm:$0xff] %v214
    %218 = vst [vmem:[#allocation7 + $0x8] sm:$0xff] %v216
    // Predicated region
    $region22: #{tpu_custom_call.1} parent=1 // pred_check
      _
    $region23: #{tpu_custom_call.1} parent=1 // pred_check_branch
      %220 = sbr.rel (0) target = $region25
    $region24: #{tpu_custom_call.1} parent=1 // pred_region
      %s222 = ssub.s32 256, 256
      %223 = vsyncadd [#allocation4], %s222
      %s224 = sshll.u32 [#allocation7], 4
      %s225 = int_to_ptr.vmem [resolvable:$true] %s224
      %230 = dma.vmem_to_hbm [thread:$0]  %s225, 256, %s3, [#allocation4], 128, 128, 8
    $region25: #{tpu_custom_call.1} parent=1 // pred_fallthru
      _
    // Predicated region
    $region26: #{tpu_custom_call.1} parent=1 // pred_check
      _
    $region27: #{tpu_custom_call.1} parent=1 // pred_check_branch
      %232 = sbr.rel (0) target = $region29
    $region28: #{tpu_custom_call.1} parent=1 // pred_region
      %233 = dma.done [#allocation4], 256
    $region29: #{tpu_custom_call.1} parent=1 // pred_fallthru
      _
    %234 = vsyncpa [#allocation3], 1
    %235 = vsyncpa [#allocation6], 1
    %236 = vsyncpa [#allocation4], 1

</llo_original>
